<compile_context>
chip_gen: v5e
topology: v5e:2x2
jax: 0.10.0
libtpu: 0.0.40
codegen_flags: <defaults>
</compile_context>

<pallas_src>
import functools

import jax
import jax.numpy as jnp
from jax import lax
from jax.experimental import pallas as pl
from jax.experimental.pallas import tpu as pltpu


def _round_up(x, m):
    return (x + m - 1) // m * m


# ---------------------------------------------------------------------------
# Pass 1: conv (fused im2col matmul, bf16 operands -> f32 acc) + per-channel
#         sum / sum-of-squares accumulated across the NHW grid axis.
# ---------------------------------------------------------------------------
def _conv_stats_kernel(patch_ref, w_ref, conv_ref, stats_ref):
    """patch_ref: (K, TN) bf16 im2col tile, w_ref: (TC, K) bf16,
    conv_ref: (TC, TN) bf16 raw conv tile,
    stats_ref: (TC, 2) f32 [sum, sumsq], resident across the NHW ("arbitrary") axis."""
    # bf16 operands feed the MXU at native rate; accumulation is f32.
    acc = jnp.dot(w_ref[...], patch_ref[...],
                  preferred_element_type=jnp.float32)          # (TC, TN) f32

    # Raw conv out in the downstream (bf16) dtype, lane-dense store.
    conv_ref[...] = acc.astype(conv_ref.dtype)

    # Per-channel partial BN statistics for this tile (cross-lane XLU reduce).
    @pl.when(pl.program_id(1) == 0)
    def _():
        stats_ref[...] = jnp.zeros_like(stats_ref)

    stats_ref[:, 0:1] += jnp.sum(acc, axis=-1, keepdims=True)
    stats_ref[:, 1:2] += jnp.sum(acc * acc, axis=-1, keepdims=True)


# ---------------------------------------------------------------------------
# Pass 2: y = conv * scale + shift ; LeakyReLU as a single vmax per element.
# ---------------------------------------------------------------------------
def _bn_act_kernel(conv_ref, ss_ref, o_ref, *, negative_slope):
    """conv_ref: (TC, TN) bf16, ss_ref: (TC, 2) f32 folded [scale, shift]."""
    y = conv_ref[...].astype(jnp.float32) * ss_ref[:, 0:1] + ss_ref[:, 1:2]
    o_ref[...] = jnp.maximum(y, negative_slope * y).astype(o_ref.dtype)


def cnn_block_forward(x_nchw, w_oihw, gamma, beta, *,
                      stride=1, padding=1, eps=1e-5, negative_slope=0.1,
                      tile_nhw=None, tile_cout=None):
    """NCHW in / NCHW out, bias-free conv -> training-mode BN -> LeakyReLU(0.1)."""
    N, Cin, H, W = x_nchw.shape
    Cout, Cin_w, KH, KW = w_oihw.shape
    assert Cin == Cin_w

    Ho = (H + 2 * padding - KH) // stride + 1
    Wo = (W + 2 * padding - KW) // stride + 1
    NHW = N * Ho * Wo                  # lane axis inside the kernels
    K = Cin * KH * KW                  # contraction axis of the fused matmul

    # ---- tile sizes (pad Cout to the cout tile, NHW to the lane tile) ----
    # MXU fill note: at production sizes use tile_cout of 128 (v5e) / up to 256
    # (v6e/v7x) and K = Cin*KH*KW >= 128 so the systolic array is actually filled.
    if tile_cout is None:
        tile_cout = 128 if Cout > 128 else _round_up(Cout, 8)
    tile_cout = _round_up(tile_cout, 8)
    Cp = _round_up(Cout, tile_cout)

    if tile_nhw is None:
        # Sweep 512..2048 on v6e (128 MiB VMEM); keep smaller on v7x (64 MiB) / v5e,
        # and on v5e consider pipeline_mode=pl.Buffered(3) on the patch input if the
        # DMA is still exposed.
        tile_nhw = min(512, _round_up(NHW, 128))
    tile_nhw = _round_up(tile_nhw, 128)
    NHWp = _round_up(NHW, tile_nhw)

    # ---- wrapper-side patch build: bf16, contiguous (K, NHW), no big transpose ----
    xb = x_nchw.astype(jnp.bfloat16)
    x_pad = jnp.pad(xb, ((0, 0), (0, 0), (padding, padding), (padding, padding)))
    x_t = jnp.transpose(x_pad, (1, 0, 2, 3))          # (Cin, N, Hp, Wp): one 1x transpose
    taps = []
    for kh in range(KH):
        for kw in range(KW):
            taps.append(x_t[:, :, kh:kh + Ho * stride:stride,
                                  kw:kw + Wo * stride:stride])
    # (Cin, KH*KW, N, Ho, Wo) -> (K, NHW): pure contiguity-preserving reshape.
    patch = jnp.stack(taps, axis=1).reshape(K, NHW)
    if NHWp != NHW:
        patch = jnp.pad(patch, ((0, 0), (0, NHWp - NHW)))
    # TODO(synk): replace this HBM-materialized patch matrix with in-kernel implicit
    # im2col (DMA a halo'd channel-major row strip into VMEM and build the taps with
    # shifted views / pltpu.roll) so x is read once instead of KH*KW times.

    w2d = w_oihw.reshape(Cout, K).astype(jnp.bfloat16)   # K ordered (cin, kh, kw)
    if Cp != Cout:
        w2d = jnp.pad(w2d, ((0, Cp - Cout), (0, 0)))

    grid = (Cp // tile_cout, NHWp // tile_nhw)

    # ---- pass 1: conv + stats ----
    conv, stats = pl.pallas_call(
        _conv_stats_kernel,
        out_shape=(jax.ShapeDtypeStruct((Cp, NHWp), jnp.bfloat16),
                   jax.ShapeDtypeStruct((Cp, 2), jnp.float32)),
        grid=grid,
        in_specs=[
            pl.BlockSpec((K, tile_nhw), lambda i, j: (0, j)),
            pl.BlockSpec((tile_cout, K), lambda i, j: (i, 0)),
        ],
        out_specs=(
            pl.BlockSpec((tile_cout, tile_nhw), lambda i, j: (i, j)),
            pl.BlockSpec((tile_cout, 2), lambda i, j: (i, 0)),
        ),
        compiler_params=pltpu.CompilerParams(
            dimension_semantics=("parallel", "arbitrary"),
            vmem_limit_bytes=64 * 1024 * 1024),
    )(patch, w2d)

    # ---- glue: fold batch stats + affine into per-channel scale/shift ((Cout,)-sized) ----
    inv_n = 1.0 / float(NHW)          # true count: padded NHW columns add 0 to both sums
    mean = stats[:, 0] * inv_n
    var = jnp.maximum(stats[:, 1] * inv_n - mean * mean, 0.0)   # clamp: E[x^2]-mean^2 cancels
    gamma_p = jnp.pad(gamma.astype(jnp.float32), (0, Cp - Cout))
    beta_p = jnp.pad(beta.astype(jnp.float32), (0, Cp - Cout))
    scale = gamma_p * lax.rsqrt(var + eps)
    shift = beta_p - mean * scale
    scale_shift = jnp.stack([scale, shift], axis=-1)             # (Cp, 2) f32

    # ---- pass 2: normalize + LeakyReLU ----
    out2d = pl.pallas_call(
        functools.partial(_bn_act_kernel, negative_slope=negative_slope),
        out_shape=jax.ShapeDtypeStruct((Cp, NHWp), jnp.float32),
        grid=grid,
        in_specs=[
            pl.BlockSpec((tile_cout, tile_nhw), lambda i, j: (i, j)),
            pl.BlockSpec((tile_cout, 2), lambda i, j: (i, 0)),
        ],
        out_specs=pl.BlockSpec((tile_cout, tile_nhw), lambda i, j: (i, j)),
        compiler_params=pltpu.CompilerParams(
            dimension_semantics=("parallel", "parallel"),
            vmem_limit_bytes=64 * 1024 * 1024),
    )(conv, scale_shift)

    out2d = out2d[:Cout, :NHW]
    # TODO(synk): in a multi-layer net keep this channel-major (Cout, NHW) bf16 layout
    # between CNNBlocks (and fuse pass 2 into the next block's conv input) instead of
    # transposing back to NCHW f32 every call.
    return jnp.transpose(out2d.reshape(Cout, N, Ho, Wo), (1, 0, 2, 3))


def _reference(x_nchw, w_oihw, gamma, beta, *,
               stride=1, padding=1, eps=1e-5, negative_slope=0.1):
    """Pure-JAX reference mirroring the PyTorch forward (training-mode BN)."""
    y = lax.conv_general_dilated(
        x_nchw.astype(jnp.float32), w_oihw.astype(jnp.float32),
        window_strides=(stride, stride),
        padding=[(padding, padding), (padding, padding)],
        dimension_numbers=("NCHW", "OIHW", "NCHW"))
    mean = jnp.mean(y, axis=(0, 2, 3), keepdims=True)
    var = jnp.mean((y - mean) ** 2, axis=(0, 2, 3), keepdims=True)
    y = (y - mean) * lax.rsqrt(var + eps)
    y = y * gamma.reshape(1, -1, 1, 1) + beta.reshape(1, -1, 1, 1)
    return jnp.where(y >= 0, y, negative_slope * y)


if __name__ == "__main__":
    # CNNBlock(in_channels=4, out_channels=8, kernel_size=3, stride=1, padding=1)
    N, Cin, H, W = 2, 4, 16, 16
    Cout, KH, KW = 8, 3, 3

    key = jax.random.PRNGKey(0)
    kx, kw_, kg, kb = jax.random.split(key, 4)
    x = jax.random.normal(kx, (N, Cin, H, W), jnp.float32)
    w = jax.random.normal(kw_, (Cout, Cin, KH, KW), jnp.float32) * 0.1
    gamma = 1.0 + 0.1 * jax.random.normal(kg, (Cout,), jnp.float32)
    beta = 0.1 * jax.random.normal(kb, (Cout,), jnp.float32)

    # tile_nhw=128 so the NHW grid axis really iterates (4 tiles) and the two-phase
    # BN accumulation is exercised even at this toy size.
    out = cnn_block_forward(x, w, gamma, beta, stride=1, padding=1, tile_nhw=128)
    out = jax.block_until_ready(out)

    ref = _reference(x, w, gamma, beta, stride=1, padding=1)
    assert out.shape == (N, Cout, H, W)
    max_err = float(jnp.max(jnp.abs(out - ref)))
    # bf16 MXU operands + bf16 conv intermediate: slightly looser tolerance than f32.
    assert jnp.allclose(out, ref, atol=2e-2, rtol=2e-2), (
        f"mismatch vs reference (max abs err {max_err})")

    print("KERNEL_OK")
</pallas_src>

<mosaic_0001>
module attributes {stable_mosaic.version = 11 : i64} {
  func.func @_conv_stats_kernel(%arg0: i32, %arg1: i32, %arg2: memref<36x128xbf16, #tpu.memory_space<vmem>>, %arg3: memref<8x36xbf16, #tpu.memory_space<vmem>>, %arg4: memref<8x128xbf16, #tpu.memory_space<vmem>>, %arg5: memref<8x2xf32, #tpu.memory_space<vmem>>) attributes {dimension_semantics = [#tpu.dimension_semantics<parallel>, #tpu.dimension_semantics<arbitrary>], iteration_bounds = array<i64: 1, 4>, scalar_prefetch = 0 : i64, scratch_operands = 0 : i64, tpu.core_type = #tpu.core_type<tc>, window_params = [{transform_indices = @transform_0, window_bounds = array<i64: 36, 128>}, {transform_indices = @transform_1, window_bounds = array<i64: 8, 36>}, {transform_indices = @transform_2, window_bounds = array<i64: 8, 128>}, {transform_indices = @transform_3, window_bounds = array<i64: 8, 2>}]} {
    %c0 = arith.constant 0 : index
    %c0_0 = arith.constant 0 : index
    %0 = vector.load %arg3[%c0, %c0_0] : memref<8x36xbf16, #tpu.memory_space<vmem>>, vector<8x36xbf16>
    %c0_1 = arith.constant 0 : index
    %c0_2 = arith.constant 0 : index
    %1 = vector.load %arg2[%c0_1, %c0_2] : memref<36x128xbf16, #tpu.memory_space<vmem>>, vector<36x128xbf16>
    %cst = arith.constant dense<0.000000e+00> : vector<8x128xf32>
    %2 = tpu.matmul %0, %1, %cst {dimension_numbers = #tpu.dot_dimension_numbers<[1], [0], [0], [1], [0, 0, 1, 1], [], []>} : vector<8x36xbf16>, vector<36x128xbf16>, vector<8x128xf32> -> vector<8x128xf32>
    %3 = arith.truncf %2 : vector<8x128xf32> to vector<8x128xbf16>
    %c0_3 = arith.constant 0 : index
    %c0_4 = arith.constant 0 : index
    %4 = vector.load %arg4[%c0_3, %c0_4] : memref<8x128xbf16, #tpu.memory_space<vmem>>, vector<8x128xbf16>
    tpu.vector_store %arg4[%c0_3, %c0_4], %3 {strides = array<i32>} : memref<8x128xbf16, #tpu.memory_space<vmem>>, vector<8x128xbf16>,
    %c0_i32 = arith.constant 0 : i32
    %5 = arith.cmpi eq, %arg1, %c0_i32 : i32
    %6 = arith.extui %5 : i1 to i32
    %c0_i32_5 = arith.constant 0 : i32
    %7 = arith.cmpi ne, %6, %c0_i32_5 : i32
    scf.if %7 {
      %cst_15 = arith.constant 0.000000e+00 : f32
      %19 = vector.broadcast %cst_15 : f32 to vector<8x2xf32>
      %c0_16 = arith.constant 0 : index
      %c0_17 = arith.constant 0 : index
      %20 = vector.load %arg5[%c0_16, %c0_17] : memref<8x2xf32, #tpu.memory_space<vmem>>, vector<8x2xf32>
      tpu.vector_store %arg5[%c0_16, %c0_17], %19 {strides = array<i32>} : memref<8x2xf32, #tpu.memory_space<vmem>>, vector<8x2xf32>,
    } else {
    }
    %c0_6 = arith.constant 0 : index
    %c0_7 = arith.constant 0 : index
    %8 = vector.load %arg5[%c0_6, %c0_7] : memref<8x2xf32, #tpu.memory_space<vmem>>, vector<8x1xf32>
    %cst_8 = arith.constant dense<0.000000e+00> : vector<8xf32>
    %9 = vector.multi_reduction <add>, %2, %cst_8 [1] : vector<8x128xf32> to vector<8xf32>
    %10 = vector.shape_cast %9 : vector<8xf32> to vector<8x1xf32>
    %11 = arith.addf %8, %10 : vector<8x1xf32>
    %c0_9 = arith.constant 0 : index
    %c0_10 = arith.constant 0 : index
    %12 = vector.load %arg5[%c0_9, %c0_10] : memref<8x2xf32, #tpu.memory_space<vmem>>, vector<8x1xf32>
    tpu.vector_store %arg5[%c0_9, %c0_10], %11 {strides = array<i32>} : memref<8x2xf32, #tpu.memory_space<vmem>>, vector<8x1xf32>,
    %c0_11 = arith.constant 0 : index
    %c1 = arith.constant 1 : index
    %13 = vector.load %arg5[%c0_11, %c1] : memref<8x2xf32, #tpu.memory_space<vmem>>, vector<8x1xf32>
    %14 = arith.mulf %2, %2 : vector<8x128xf32>
    %cst_12 = arith.constant dense<0.000000e+00> : vector<8xf32>
    %15 = vector.multi_reduction <add>, %14, %cst_12 [1] : vector<8x128xf32> to vector<8xf32>
    %16 = vector.shape_cast %15 : vector<8xf32> to vector<8x1xf32>
    %17 = arith.addf %13, %16 : vector<8x1xf32>
    %c0_13 = arith.constant 0 : index
    %c1_14 = arith.constant 1 : index
    %18 = vector.load %arg5[%c0_13, %c1_14] : memref<8x2xf32, #tpu.memory_space<vmem>>, vector<8x1xf32>
    tpu.vector_store %arg5[%c0_13, %c1_14], %17 {strides = array<i32>} : memref<8x2xf32, #tpu.memory_space<vmem>>, vector<8x1xf32>,
    return
  }
  func.func @transform_0(%arg0: i32, %arg1: i32) -> (i32, i32) {
    %c0_i32 = arith.constant 0 : i32
    %c0_i32_0 = arith.constant 0 : i32
    return %c0_i32, %arg1 : i32, i32
  }
  func.func @transform_1(%arg0: i32, %arg1: i32) -> (i32, i32) {
    %c0_i32 = arith.constant 0 : i32
    %c0_i32_0 = arith.constant 0 : i32
    return %arg0, %c0_i32 : i32, i32
  }
  func.func @transform_2(%arg0: i32, %arg1: i32) -> (i32, i32) {
    %c0_i32 = arith.constant 0 : i32
    return %arg0, %arg1 : i32, i32
  }
  func.func @transform_3(%arg0: i32, %arg1: i32) -> (i32, i32) {
    %c0_i32 = arith.constant 0 : i32
    %c0_i32_0 = arith.constant 0 : i32
    return %arg0, %c0_i32 : i32, i32
  }
}

</mosaic_0001>

<llo_original>
// kernel: tpu_custom_call.1
$region0: #{tpu_custom_call.1}
  #allocation0 [shape = 'u32[]', space=smem, size = 0x4, offset = 0x4, fixed_abs, tag = 'smem constant byte address 0x4 - core index']
  #allocation1 [shape = 'u32[72,128]{1,0:T(1,128)}', space=vmem, size = 0x9000, scoped, tag = 'internal scratch']
  %s0 = inlined_call_operand.hbm [shape: bf16[36,512], index: 0, kind: input, shape index: {}]
  %s1 = inlined_call_operand.hbm [shape: bf16[8,36], index: 1, kind: input, shape index: {}]
  %s2 = inlined_call_operand.hbm [shape: bf16[8,512], index: 2, kind: output, shape index: {0}]
  %s3 = inlined_call_operand.vmem [shape: f32[8,2], index: 3, kind: output, shape index: {1}]
  %4 = xla_tuple %s2, %s3
  %s5 = sld [smem:[#allocation0]]
  $region61: #{tpu_custom_call.1} parent=0
    _
  %s7 = ssub.s32 1, %s5
  %s8 = scalar_select 0, %s7, %s5
  $region1: #{tpu_custom_call.1} parent=0
    #allocation2 [shape = 'u8[20480]{0}', space=vmem, size = 0x5000, scoped, tag = 'input window, operand 0']
    #allocation3 [shape = 's32[2]{0}', space=sflag, size = 0x8, scoped, tag = 'scoped memory for tpu_custom_call.1']
    #allocation4 [shape = 's32[2]{0}', space=sflag, size = 0x8, scoped, tag = 'scoped memory for tpu_custom_call.1']
    #allocation5 [shape = 'u8[2048]{0}', space=vmem, size = 0x800, scoped, tag = 'input window, operand 1, single buffered']
    #allocation6 [shape = 's32[1]{0}', space=sflag, size = 0x4, scoped, tag = 'scoped memory for tpu_custom_call.1']
    #allocation7 [shape = 'u8[4096]{0}', space=vmem, size = 0x1000, scoped, tag = 'output window, operand 0']
    %9 = vsyncpa [#allocation3], 0
    %s10 = scalar_lea.sflag [#allocation3], 1
    %11 = vsyncpa %s10, 0
    %12 = vsyncpa [#allocation6], 0
    %13 = vsyncpa [#allocation4], 0
    %s14 = scalar_lea.sflag [#allocation4], 1
    %15 = vsyncpa %s14, 0
    loop: start=0, step=1, limit=6
    $region2: #{tpu_custom_call.1} parent=1 // loop_pre_header
      _
    $region3: #{tpu_custom_call.1} parent=1 // loop_header
      %s17 = sphi 0, %s21
      %p18 = scmp.ge.s32.totalorder %s17, 6
      %s24 = sphi 0, %s36
      %s25 = sphi 0, %s32
      %s26 = sphi 0, %s24
      %s27 = sphi 0, %s25
      %s28 = sphi 0, %s26
      %s29 = sphi 0, %s27
      %s39 = sphi 0, %s41
      %s42 = sphi 0, %s39
      %s43 = sphi 0, %s42
      %s59 = sphi 0, %s43
      %s65 = sphi 0, %s67
      %s68 = sphi 0, %s65
      %s69 = sphi 0, %s68
      %s85 = sphi 0, %s69
      %s93 = sphi 0, %s95
      %s96 = sphi 0, %s93
      %s97 = sphi 0, %s96
      %s113 = sphi 0, %s97
      %s119 = sphi 0, %s121
      %s122 = sphi 0, %s119
      %s123 = sphi 0, %s122
      %s139 = sphi 0, %s123
    $region4: #{tpu_custom_call.1} parent=1 // loop_header_branch
      %20 = sbr.rel (%p18) target = $region8
    $region5: #{tpu_custom_call.1} parent=1 // loop_body
      %s22 = ssub.s32 %s17, 1
      %s23 = ssub.s32 %s17, 2
      %s30 = sadd.s32 1, %s25
      %p31 = scmp.ge.s32.totalorder %s30, 4
      %s32 = scalar_select %p31, 0, %s30
      %s33 = sadd.s32 1, %s24
      %s34 = scalar_select %p31, %s33, %s24
      %p35 = scmp.ge.s32.totalorder %s34, 1
      %s36 = scalar_select %p35, 0, %s34
      %s37 = ssub.s32 %s25, %s32
      %p38 = scmp.eq.s32.totalorder %s37, 0
      %s40 = sadd.s32 %s39, 1
      %s41 = scalar_select %p38, %s39, %s40
      %p44 = pneg %p38
      %p45 = scmp.eq.s32.totalorder %s17, 3
      %p46 = por %p44, %p45
      %p47 = scmp.ne.s32.totalorder %s39, %s42
      %p48 = scmp.eq.s32.totalorder %s17, 0
      %p49 = por %p47, %p48
      %p50 = scmp.ne.s32.totalorder %s39, %s42
      %p51 = scmp.eq.s32.totalorder %s22, 3
      %p52 = por %p50, %p51
      %p53 = scmp.ne.s32.totalorder %s42, %s43
      %p54 = scmp.eq.s32.totalorder %s22, 0
      %p55 = por %p53, %p54
      %p56 = scmp.ne.s32.totalorder %s42, %s43
      %p57 = scmp.eq.s32.totalorder %s23, 3
      %p58 = por %p56, %p57
      %p60 = scmp.ne.s32.totalorder %s43, %s59
      %p61 = scmp.eq.s32.totalorder %s23, 0
      %p62 = por %p60, %p61
      %s63 = ssub.s32 %s24, %s36
      %p64 = scmp.eq.s32.totalorder %s63, 0
      %s66 = sadd.s32 %s65, 1
      %s67 = scalar_select %p64, %s65, %s66
      %p70 = pneg %p64
      %p71 = scmp.eq.s32.totalorder %s17, 3
      %p72 = por %p70, %p71
      %p73 = scmp.ne.s32.totalorder %s65, %s68
      %p74 = scmp.eq.s32.totalorder %s17, 0
      %p75 = por %p73, %p74
      %p76 = scmp.ne.s32.totalorder %s65, %s68
      %p77 = scmp.eq.s32.totalorder %s22, 3
      %p78 = por %p76, %p77
      %p79 = scmp.ne.s32.totalorder %s68, %s69
      %p80 = scmp.eq.s32.totalorder %s22, 0
      %p81 = por %p79, %p80
      %p82 = scmp.ne.s32.totalorder %s68, %s69
      %p83 = scmp.eq.s32.totalorder %s23, 3
      %p84 = por %p82, %p83
      %p86 = scmp.ne.s32.totalorder %s69, %s85
      %p87 = scmp.eq.s32.totalorder %s23, 0
      %p88 = por %p86, %p87
      %s89 = ssub.s32 %s24, %s36
      %s90 = ssub.s32 %s25, %s32
      %s91 = sor.u32 %s89, %s90
      %p92 = scmp.eq.s32.totalorder %s91, 0
      %s94 = sadd.s32 %s93, 1
      %s95 = scalar_select %p92, %s93, %s94
      %p98 = pneg %p92
      %p99 = scmp.eq.s32.totalorder %s17, 3
      %p100 = por %p98, %p99
      %p101 = scmp.ne.s32.totalorder %s93, %s96
      %p102 = scmp.eq.s32.totalorder %s17, 0
      %p103 = por %p101, %p102
      %p104 = scmp.ne.s32.totalorder %s93, %s96
      %p105 = scmp.eq.s32.totalorder %s22, 3
      %p106 = por %p104, %p105
      %p107 = scmp.ne.s32.totalorder %s96, %s97
      %p108 = scmp.eq.s32.totalorder %s22, 0
      %p109 = por %p107, %p108
      %p110 = scmp.ne.s32.totalorder %s96, %s97
      %p111 = scmp.eq.s32.totalorder %s23, 3
      %p112 = por %p110, %p111
      %p114 = scmp.ne.s32.totalorder %s97, %s113
      %p115 = scmp.eq.s32.totalorder %s23, 0
      %p116 = por %p114, %p115
      %s117 = ssub.s32 %s24, %s36
      %p118 = scmp.eq.s32.totalorder %s117, 0
      %s120 = sadd.s32 %s119, 1
      %s121 = scalar_select %p118, %s119, %s120
      %p124 = pneg %p118
      %p125 = scmp.eq.s32.totalorder %s17, 3
      %p126 = por %p124, %p125
      %p127 = scmp.ne.s32.totalorder %s119, %s122
      %p128 = scmp.eq.s32.totalorder %s17, 0
      %p129 = por %p127, %p128
      %p130 = scmp.ne.s32.totalorder %s119, %s122
      %p131 = scmp.eq.s32.totalorder %s22, 3
      %p132 = por %p130, %p131
      %p133 = scmp.ne.s32.totalorder %s122, %s123
      %p134 = scmp.eq.s32.totalorder %s22, 0
      %p135 = por %p133, %p134
      %p136 = scmp.ne.s32.totalorder %s122, %s123
      %p137 = scmp.eq.s32.totalorder %s23, 3
      %p138 = por %p136, %p137
      %p140 = scmp.ne.s32.totalorder %s123, %s139
      %p141 = scmp.eq.s32.totalorder %s23, 0
      %p142 = por %p140, %p141
      %p143 = scmp.le.s32.totalorder 1, %s17
      %p144 = scmp.lt.s32.totalorder %s17, 5
      %p145 = pnand %p143, %p144
      %p146 = pneg %p145
      // Predicated region
      $region9: #{tpu_custom_call.1} parent=5 // pred_check
        _
      $region10: #{tpu_custom_call.1} parent=5 // pred_check_branch
        %148 = sbr.rel (%p145) target = $region12
      $region11: #{tpu_custom_call.1} parent=5 // pred_region
        %s149 = ssub.s32 %s17, 1
        // Predicated region
        $region13: #{tpu_custom_call.1} parent=11 // pred_check
          %p150 = pneg %p81
        $region14: #{tpu_custom_call.1} parent=11 // pred_check_branch
          %152 = sbr.rel (%p150) target = $region16
        $region15: #{tpu_custom_call.1} parent=11 // pred_region
          %154 = vsyncadd [#allocation6], 0
          %s155 = smul.addr %s26, 4
          %s156 = scalar_lea.hbm %s1, %s155
          %s158 = sshll.u32 %s156, 4
          %s159 = int_to_ptr.hbm [resolvable:$true] %s158
          %s160 = sshll.u32 [#allocation5], 4
          %s161 = int_to_ptr.vmem [resolvable:$true] %s160
          %163 = dma.hbm_to_vmem [thread:$0]  %s159, 64, %s161, [#allocation6]
        $region16: #{tpu_custom_call.1} parent=11 // pred_fallthru
          _
      $region12: #{tpu_custom_call.1} parent=5 // pred_fallthru
        _
      %p164 = scmp.lt.s32.totalorder %s17, 4
      // Predicated region
      $region17: #{tpu_custom_call.1} parent=5 // pred_check
        %p165 = pneg %p164
      $region18: #{tpu_custom_call.1} parent=5 // pred_check_branch
        %167 = sbr.rel (%p165) target = $region20
      $region19: #{tpu_custom_call.1} parent=5 // pred_region
        // Predicated region
        $region21: #{tpu_custom_call.1} parent=19 // pred_check
          %p168 = pneg %p49
        $region22: #{tpu_custom_call.1} parent=19 // pred_check_branch
          %170 = sbr.rel (%p168) target = $region24
        $region23: #{tpu_custom_call.1} parent=19 // pred_region
          %s171 = sand.u32 %s39, 1
          %s172 = scalar_lea.sflag [#allocation3], %s171
          %s173 = sand.u32 %s39, 1
          %s174 = smul.addr %s173, 20
          %s175 = scalar_lea.vmem [#allocation2], %s174
          %177 = vsyncadd %s172, 0
          %s178 = smul.addr %s25, 4
          %s179 = scalar_lea.hbm %s0, %s178
          %s180 = sshll.u32 %s179, 4
          %s181 = int_to_ptr.hbm [resolvable:$true] %s180
          %s182 = sshll.u32 %s175, 4
          %s183 = int_to_ptr.vmem [resolvable:$true] %s182
          %188 = dma.hbm_to_vmem [thread:$0]  %s181, 320, %s183, %s172, 256, 64, 4
        $region24: #{tpu_custom_call.1} parent=19 // pred_fallthru
          _
      $region20: #{tpu_custom_call.1} parent=5 // pred_fallthru
        _
      %p189 = scmp.le.s32.totalorder 1, %s17
      %p190 = scmp.lt.s32.totalorder %s17, 5
      %p191 = pnand %p189, %p190
      %p192 = pneg %p191
      // Predicated region
      $region25: #{tpu_custom_call.1} parent=5 // pred_check
        _
      $region26: #{tpu_custom_call.1} parent=5 // pred_check_branch
        %194 = sbr.rel (%p191) target = $region28
      $region27: #{tpu_custom_call.1} parent=5 // pred_region
        %s195 = ssub.s32 %s17, 1
        %s196 = sand.u32 %s42, 1
        %s197 = scalar_lea.sflag [#allocation3], %s196
        %s198 = sand.u32 %s42, 1
        %s199 = smul.addr %s198, 20
        %s200 = scalar_lea.vmem [#allocation2], %s199
        // Predicated region
        $region29: #{tpu_custom_call.1} parent=27 // pred_check
          %p201 = pneg %p55
        $region30: #{tpu_custom_call.1} parent=27 // pred_check_branch
          %203 = sbr.rel (%p201) target = $region32
        $region31: #{tpu_custom_call.1} parent=27 // pred_region
          %205 = dma.done %s197, 320
        $region32: #{tpu_custom_call.1} parent=27 // pred_fallthru
          _
        // Predicated region
        $region33: #{tpu_custom_call.1} parent=27 // pred_check
          %p206 = pneg %p81
        $region34: #{tpu_custom_call.1} parent=27 // pred_check_branch
          %208 = sbr.rel (%p206) target = $region36
        $region35: #{tpu_custom_call.1} parent=27 // pred_region
          %210 = dma.done [#allocation6], 64
        $region36: #{tpu_custom_call.1} parent=27 // pred_fallthru
          _
        %s211 = sand.u32 %s42, 1
        %s212 = scalar_lea.sflag [#allocation3], %s211
        %s213 = sand.u32 %s42, 1
        %s214 = smul.addr %s213, 20
        %s215 = scalar_lea.vmem [#allocation2], %s214
        %p216 = pneg %p55
        %p217 = pneg %p52
        %p218 = pneg %p81
        %p219 = pneg %p78
        %p220 = pneg %p109
        %p221 = pneg %p106
        %s222 = sand.u32 %s96, 1
        %s223 = scalar_lea.sflag [#allocation4], %s222
        %s224 = sand.u32 %s96, 1
        %s225 = smul.addr %s224, 4
        %s226 = scalar_lea.vmem [#allocation7], %s225
        %p227 = pneg %p135
        %p228 = pneg %p132
        %p229 = scmp.lt.s32.totalorder %s26, 0
        %s230 = scalar_select %p229, %s26, 0
        %s231 = smul.addr %s230, 8
        %s232 = scalar_lea.vmem %s3, %s231
        %p233 = scmp.lt.s32.totalorder %s26, 0
        %s234 = scalar_select %p233, %s26, 0
        %s235 = smul.addr %s234, 8
        %s236 = scalar_lea.vmem %s3, %s235
        %v238 = vld [vmem:[#allocation5] sm:$0xf]
        %v239 = vld [vmem:[%s200] sm:$0xf]
        %v240 = vld [vmem:[%s200 + $0x4] sm:$0xf]
        %v241 = vld [vmem:[%s200 + $0x8] sm:$0xf]
        %v242 = vld [vmem:[%s200 + $0xc] sm:$0xf]
        %v243 = vld [vmem:[%s200 + $0x10] sm:$0x3]
        %v249 = vunpack.c.l.b16 %v239
        %v250 = vunpack.c.l.b16 %v240
        %v251 = vunpack.c.l.b16 %v241
        %v252 = vunpack.c.l.b16 %v242
        %v253 = vunpack.c.l.b16 %v243
        %v254 = vpack.c.b16 %v250, %v249
        %v255 = vpack.c.b16 %v252, %v251
        %v256 = vpack.c.b16 %v253, %v253
        %vm259 = vcmask 293888
        %v261 = vsel %vm259, %v238, 0
        %vm263 = vcmask 1041408
        %v265 = vsel %vm263, %v256, 0
        %267 = vmatpush.bf16.msra.mxu0 0
        %268 = vmatpush.bf16.msra.mxu0 0
        %269 = vmatpush.bf16.msra.mxu0 0
        %270 = vmatpush.bf16.msra.mxu0 0
        %271 = vmatpush.bf16.msra.mxu0 0
        %272 = vmatpush.bf16.msra.mxu0 %v265
        %273 = vmatpush.bf16.msra.mxu0 %v255
        %274 = vmatpush.bf16.msra.mxu0 %v254
        %275 = vmatmul.bf16.gmra.mxu0 %v261
        %v276 = vpop.f32.mrf.mxu0
        %v277 = vadd.f32 0.0, %v276
        %v278 = vpop.f32.mrf.mxu0
        %279 = vdwg.mxu0
        %v280 = vpack.c.bf16 %v277, %v277
        %281 = vst [vmem:[%s226] sm:$0xf] %v280
        %p282 = scmp.eq.s32.totalorder %s27, 0
        // Predicated region
        $region37: #{tpu_custom_call.1} parent=27 // pred_check
          %p283 = pneg %p282
        $region38: #{tpu_custom_call.1} parent=27 // pred_check_branch
          %285 = sbr.rel (%p283) target = $region40
        $region39: #{tpu_custom_call.1} parent=27 // pred_region
          %vm286 = vcmask 15360
          %287 = vst.msk [vmem:[%s236] sm:$0xff] %vm286, 0.0
        $region40: #{tpu_custom_call.1} parent=27 // pred_fallthru
          _
        %v288 = vld [vmem:[%s236] sm:$0xff]
        %289 = vadd.xlane.f32.xlu0 %v277
        %v290 = vpop.xlane.xlu0 %289
        %v291 = vadd.f32 %v288, %v290
        %vm292 = vcmask 7168
        %293 = vst.msk [vmem:[%s236] sm:$0xff] %vm292, %v291
        %v294 = vld [vmem:[%s236] sm:$0xff]
        %v295 = vmul.f32 %v277, %v277
        %296 = vadd.xlane.f32.xlu0 %v295
        %v297 = vpop.xlane.xlu0 %296
        %v298 = vadd.f32 %v294, %v297
        %vm299 = vcmask 15368
        %300 = vst.msk [vmem:[%s236] sm:$0xff] %vm299, %v298
        %s301 = sand.u32 %s96, 1
        %s302 = scalar_lea.sflag [#allocation4], %s301
        %s303 = sand.u32 %s96, 1
        %s304 = smul.addr %s303, 4
        %s305 = scalar_lea.vmem [#allocation7], %s304
        %p306 = scmp.lt.s32.totalorder %s26, 0
        %s307 = scalar_select %p306, %s26, 0
        %s308 = smul.addr %s307, 8
        %s309 = scalar_lea.vmem %s3, %s308
        // Predicated region
        $region41: #{tpu_custom_call.1} parent=27 // pred_check
          %p310 = pneg %p106
        $region42: #{tpu_custom_call.1} parent=27 // pred_check_branch
          %312 = sbr.rel (%p310) target = $region44
        $region43: #{tpu_custom_call.1} parent=27 // pred_region
          %314 = vsyncadd %s302, 0
          %s315 = smul.addr %s26, 4
          %s316 = sadd.s32 %s27, %s315
          %s317 = smul.addr %s316, 4
          %s318 = scalar_lea.hbm %s2, %s317
          %s320 = sshll.u32 %s305, 4
          %s321 = int_to_ptr.vmem [resolvable:$true] %s320
          %s322 = sshll.u32 %s318, 4
          %s323 = int_to_ptr.hbm [resolvable:$true] %s322
          %325 = dma.vmem_to_hbm [thread:$0]  %s321, 64, %s323, %s302
        $region44: #{tpu_custom_call.1} parent=27 // pred_fallthru
          _
        // Predicated region
        $region45: #{tpu_custom_call.1} parent=27 // pred_check
          %p326 = pneg %p132
        $region46: #{tpu_custom_call.1} parent=27 // pred_check_branch
          %328 = sbr.rel (%p326) target = $region48
        $region47: #{tpu_custom_call.1} parent=27 // pred_region
          _
        $region48: #{tpu_custom_call.1} parent=27 // pred_fallthru
          _
        // Predicated region
        $region49: #{tpu_custom_call.1} parent=27 // pred_check
          %p329 = pneg %p132
        $region50: #{tpu_custom_call.1} parent=27 // pred_check_branch
          %331 = sbr.rel (%p329) target = $region52
        $region51: #{tpu_custom_call.1} parent=27 // pred_region
          %p332 = scmp.lt.s32.totalorder %s26, 0
          %s333 = scalar_select %p332, %s26, 0
          %s334 = smul.addr %s333, 8
          %s335 = scalar_lea.vmem %s3, %s334
        $region52: #{tpu_custom_call.1} parent=27 // pred_fallthru
          _
      $region28: #{tpu_custom_call.1} parent=5 // pred_fallthru
        _
      %p336 = scmp.le.s32.totalorder 2, %s17
      // Predicated region
      $region53: #{tpu_custom_call.1} parent=5 // pred_check
        %p337 = pneg %p336
      $region54: #{tpu_custom_call.1} parent=5 // pred_check_branch
        %339 = sbr.rel (%p337) target = $region56
      $region55: #{tpu_custom_call.1} parent=5 // pred_region
        %s340 = ssub.s32 %s17, 2
        // Predicated region
        $region57: #{tpu_custom_call.1} parent=55 // pred_check
          %p341 = pneg %p112
        $region58: #{tpu_custom_call.1} parent=55 // pred_check_branch
          %343 = sbr.rel (%p341) target = $region60
        $region59: #{tpu_custom_call.1} parent=55 // pred_region
          %s344 = sand.u32 %s97, 1
          %s345 = scalar_lea.sflag [#allocation4], %s344
          %s346 = sand.u32 %s97, 1
          %s347 = smul.addr %s346, 4
          %s348 = scalar_lea.vmem [#allocation7], %s347
          %350 = dma.done %s345, 64
        $region60: #{tpu_custom_call.1} parent=55 // pred_fallthru
          _
      $region56: #{tpu_custom_call.1} parent=5 // pred_fallthru
        _
    $region6: #{tpu_custom_call.1} parent=1 // loop_footer
      %s21 = sadd.s32 1, %s17
    $region7: #{tpu_custom_call.1} parent=1 // loop_footer_branch
      %16 = sbr.rel target = $region3
    $region8: #{tpu_custom_call.1} parent=1 // loop_exit
      _
    %351 = vsyncpa [#allocation3], 1
    %s352 = scalar_lea.sflag [#allocation3], 1
    %353 = vsyncpa %s352, 1
    %354 = vsyncpa [#allocation6], 1
    %355 = vsyncpa [#allocation4], 1
    %s356 = scalar_lea.sflag [#allocation4], 1
    %357 = vsyncpa %s356, 1

</llo_original>
